<compile_context>
chip_gen: v7x
topology: tpu7x:2x2x1
jax: 0.10.0
libtpu: 0.0.40
codegen_flags: <defaults>
</compile_context>

<pallas_src>
import numpy as np
import jax
import jax.numpy as jnp
from jax import lax
from jax.experimental import pallas as pl
from jax.experimental.pallas import tpu as pltpu

# ---------------- configuration (small, consistent with the module) ----------
B = 2
IMAGE_SIZE = 16
IN_CHANNELS = 16          # forward requires x channels == embed_dim
EMBED_DIM = 16            # C
PATCH_SIZE = 1            # unused in forward
NUM_HEADS = 4             # unused in forward
NUM_OFFSET_GROUPS = 2     # G
OFFSET_K = 2              # offset_kernel_size == offset_stride
OFFSET_DIMS = EMBED_DIM // NUM_OFFSET_GROUPS   # D = 8

G = NUM_OFFSET_GROUPS
D = OFFSET_DIMS
GD = G * D                                      # 16 stacked conv channels
H = W = IMAGE_SIZE
HC, WC = H // OFFSET_K, W // OFFSET_K
BG = B * G
N_PATCH = HC * WC                               # 64 patches per image
BN = B * N_PATCH                                # 128  -> lane dimension
F_X = EMBED_DIM * OFFSET_K * OFFSET_K           # 64   patch features (all C chans)
CIN_G = OFFSET_DIMS // NUM_OFFSET_GROUPS        # conv-group in-channels  = 4
COUT_G = OFFSET_DIMS // NUM_OFFSET_GROUPS       # conv-group out-channels = 4
LN_EPS = 1e-5

# Packed-parameter buffer layout (single lane-dense VMEM input):
#   rows 0:16, cols 0:64   -> stacked composed conv weight  (G*D, C*k*k)
#   rows 0:16, col  64     -> stacked composed conv bias
#   rows 0:16, col  65     -> LayerNorm gamma (tiled per group)
#   rows 0:16, col  66     -> LayerNorm beta  (tiled per group)
#   rows 16:20, cols 0:16  -> block-diagonal final 1x1 conv weight (2G, G*D)
PRM_ROWS = 24
PRM_COLS = 128


# ---------------- in-kernel helpers ------------------------------------------
def _erf(x):
    # Abramowitz & Stegun 7.1.26 rational approximation (max err ~1.5e-7).
    # The divide is an EUP approx reciprocal + one Newton step (keeps the
    # divide off the VALU without losing precision).
    a1 = jnp.float32(0.254829592)
    a2 = jnp.float32(-0.284496736)
    a3 = jnp.float32(1.421413741)
    a4 = jnp.float32(-1.453152027)
    a5 = jnp.float32(1.061405429)
    p = jnp.float32(0.3275911)
    sign = jnp.where(x >= 0, jnp.float32(1.0), jnp.float32(-1.0))
    ax = jnp.abs(x)
    den = 1.0 + p * ax
    t = pl.reciprocal(den, approx=True)
    t = t * (2.0 - den * t)                      # one Newton refinement step
    poly = ((((a5 * t + a4) * t + a3) * t + a2) * t + a1) * t
    return sign * (1.0 - poly * jnp.exp(-ax * ax))


def _gelu_exact(x):
    # PyTorch nn.GELU() default: 0.5*x*(1+erf(x/sqrt(2)))
    return 0.5 * x * (1.0 + _erf(x * jnp.float32(0.7071067811865476)))


# ---------------- fused Pallas kernel -----------------------------------------
def fused_offset_kernel(p_ref, prm_ref, o_ref):
    # p   : (F_X, BN)        channels-major patch matrix of x  (rows: (c,kh,kw))
    # prm : (24, 128)        packed parameters (layout documented above)
    # o   : (2*G, BN)        offsets, lane-dense (row = g*2 + {x,y})
    hp = lax.Precision.HIGHEST

    pt = p_ref[...]                              # (64, 128)
    w = prm_ref[0:GD, 0:F_X]                     # (16, 64)  composed conv weight
    b = prm_ref[0:GD, F_X:F_X + 1]               # (16, 1)   composed conv bias
    gamma = prm_ref[0:GD, F_X + 1:F_X + 2]       # (16, 1)
    beta = prm_ref[0:GD, F_X + 2:F_X + 3]        # (16, 1)
    wo = prm_ref[GD:GD + 2 * G, 0:GD]            # (4, 16)   block-diag 1x1 conv

    # composed (Wq ∘ grouped stride-k conv): one matmul for both groups.
    y = jnp.dot(w, pt, preferred_element_type=jnp.float32, precision=hp) + b

    # LayerNorm per group over the D=8 channel rows (sublane-tile aligned halves).
    def _ln(z):                                  # z: (D, BN)
        mu = jnp.mean(z, axis=0, keepdims=True)
        var = jnp.mean((z - mu) * (z - mu), axis=0, keepdims=True)
        return (z - mu) * lax.rsqrt(var + jnp.float32(LN_EPS))

    y = jnp.concatenate([_ln(y[g * D:(g + 1) * D, :]) for g in range(G)], axis=0)
    y = _gelu_exact(y * gamma + beta)            # (16, 128)

    # block-diagonal final 1x1 conv (D -> 2 per group): one matmul, one store.
    o_ref[...] = jnp.dot(wo, y, preferred_element_type=jnp.float32,
                         precision=hp).astype(o_ref.dtype)


# ---------------- wrapper ------------------------------------------------------
def dat_forward(x, pbuf):
    """x: (B, C, H, W) float32; returns offset: (B*G, 2, Hc, Wc)."""
    Bx, C, Hx, Wx = x.shape
    hc, wc = Hx // OFFSET_K, Wx // OFFSET_K
    bn = Bx * hc * wc

    # channels-major patch matrix P^T: rows = (c, kh, kw), cols = (b, hc, wc).
    # (kernel_size == stride, pad=0, so patches are a pure reshape/transpose;
    #  allow_input_fusion below lets XLA fuse it into the pallas input instead
    #  of a standalone HBM-roundtrip transpose.)
    p = x.reshape(Bx, C, hc, OFFSET_K, wc, OFFSET_K)
    p = jnp.transpose(p, (1, 3, 5, 0, 2, 4)).reshape(F_X, bn)

    out = pl.pallas_call(
        fused_offset_kernel,
        out_shape=jax.ShapeDtypeStruct((2 * G, bn), jnp.float32),
        in_specs=[
            pl.BlockSpec(memory_space=pltpu.MemorySpace.VMEM),   # patch matrix
            pl.BlockSpec(memory_space=pltpu.MemorySpace.VMEM),   # packed params
        ],
        out_specs=pl.BlockSpec(memory_space=pltpu.MemorySpace.VMEM),
        compiler_params=pltpu.CompilerParams(
            allow_input_fusion=[True, False]),
    )(p, pbuf)

    # lane-dense (2G, B*N) -> (B*G, 2, Hc, Wc)  (tiny XLA rearrangement)
    offset = out.reshape(G, 2, Bx, hc, wc)
    offset = jnp.transpose(offset, (2, 0, 1, 3, 4)).reshape(Bx * G, 2, hc, wc)
    return offset


# ---------------- pure-JAX reference (uncomposed, conv-based, HIGHEST) ---------
def reference(x, wq_t, bq_t, wg_t, bg_t, gamma, beta, wo_t):
    dn = ("NCHW", "OIHW", "NCHW")
    hp = lax.Precision.HIGHEST
    q = lax.conv_general_dilated(x, wq_t, (1, 1), "VALID",
                                 dimension_numbers=dn, precision=hp)
    q = q + bq_t[None, :, None, None]
    Bx, C, Hx, Wx = x.shape
    q_off = q.reshape(Bx, G, D, Hx, Wx).reshape(Bx * G, D, Hx, Wx)
    y = lax.conv_general_dilated(q_off, wg_t, (OFFSET_K, OFFSET_K), "VALID",
                                 dimension_numbers=dn,
                                 feature_group_count=G, precision=hp)
    y = y + bg_t[None, :, None, None]
    yt = jnp.transpose(y, (0, 2, 3, 1))
    mu = yt.mean(-1, keepdims=True)
    var = ((yt - mu) ** 2).mean(-1, keepdims=True)
    yt = (yt - mu) / jnp.sqrt(var + LN_EPS) * gamma + beta
    yt = jax.nn.gelu(yt, approximate=False)
    y = jnp.transpose(yt, (0, 3, 1, 2))
    out = lax.conv_general_dilated(y, wo_t, (1, 1), "VALID",
                                   dimension_numbers=dn, precision=hp)
    return out


# ---------------- parameter setup ---------------------------------------------
def make_params(key):
    ks = jax.random.split(key, 7)
    # PyTorch-shaped parameters (deterministic synthetic init)
    wq_t = 0.1 * jax.random.normal(ks[0], (EMBED_DIM, EMBED_DIM, 1, 1), jnp.float32)
    bq_t = 0.1 * jax.random.normal(ks[1], (EMBED_DIM,), jnp.float32)
    wg_t = 0.1 * jax.random.normal(ks[2], (D, CIN_G, OFFSET_K, OFFSET_K), jnp.float32)
    bg_t = 0.1 * jax.random.normal(ks[3], (D,), jnp.float32)
    gamma = 1.0 + 0.1 * jax.random.normal(ks[4], (D,), jnp.float32)
    beta = 0.1 * jax.random.normal(ks[5], (D,), jnp.float32)
    wo_t = 0.1 * jax.random.normal(ks[6], (2, D, 1, 1), jnp.float32)

    wq_np = np.asarray(wq_t, np.float64)[:, :, 0, 0]     # (C_out, C_in)
    bq_np = np.asarray(bq_t, np.float64)
    wg_np = np.asarray(wg_t, np.float64)                 # (D, CIN_G, k, k)
    bg_np = np.asarray(bg_t, np.float64)
    gamma_np = np.asarray(gamma, np.float64)
    beta_np = np.asarray(beta, np.float64)
    wo_np = np.asarray(wo_t, np.float64)[:, :, 0, 0]     # (2, D)

    # ---- host-side weight folding: Wq (1x1 conv) ∘ grouped stride-k conv ----
    # composed[g, o, c, kh, kw] = sum_ci wg[o, ci, kh, kw] * Wq[g*D + gi*CIN_G + ci, c]
    # composed_bias[g, o]       = bg[o] + sum_ci bq[g*D + gi*CIN_G + ci] * sum_{kh,kw} wg[o,ci]
    wcomp = np.zeros((G, D, EMBED_DIM, OFFSET_K, OFFSET_K), np.float64)
    bcomp = np.zeros((G, D), np.float64)
    for g in range(G):
        for o in range(D):
            gi = o // COUT_G                              # conv sub-group of out chan o
            bacc = bg_np[o]
            for c in range(CIN_G):
                qch = g * D + gi * CIN_G + c              # q channel feeding this tap
                wcomp[g, o] += wq_np[qch][:, None, None] * wg_np[o, c][None, :, :]
                bacc += bq_np[qch] * wg_np[o, c].sum()
            bcomp[g, o] = bacc
    wcomp = wcomp.reshape(GD, F_X)                        # row = g*D+o, col = (c,kh,kw)
    bcomp = bcomp.reshape(GD)

    # Block-diagonal final 1x1 conv weight: row = g*2+ch, col = g*D+o.
    wo_blk = np.zeros((2 * G, GD), np.float64)
    for g in range(G):
        wo_blk[g * 2:(g + 1) * 2, g * D:(g + 1) * D] = wo_np

    # ---- pack everything into one lane-dense VMEM buffer ----
    pbuf = np.zeros((PRM_ROWS, PRM_COLS), np.float32)
    pbuf[0:GD, 0:F_X] = wcomp
    pbuf[0:GD, F_X] = bcomp
    pbuf[0:GD, F_X + 1] = np.tile(gamma_np, G)
    pbuf[0:GD, F_X + 2] = np.tile(beta_np, G)
    pbuf[GD:GD + 2 * G, 0:GD] = wo_blk

    torch_params = (wq_t, bq_t, wg_t, bg_t, gamma, beta, wo_t)
    return torch_params, jnp.asarray(pbuf)


if __name__ == "__main__":
    key = jax.random.PRNGKey(0)
    k_x, k_p = jax.random.split(key)
    x = jax.random.normal(k_x, (B, IN_CHANNELS, H, W), jnp.float32)

    torch_params, pbuf = make_params(k_p)

    offset = jax.jit(dat_forward)(x, pbuf)
    offset = jax.block_until_ready(offset)

    ref = jax.block_until_ready(reference(x, *torch_params))

    assert offset.shape == (BG, 2, HC, WC), offset.shape
    # HIGHEST-precision in-kernel matmuls + Newton-refined erf reciprocal:
    # remaining error is ~1e-5 level (erf rational approx, rsqrt), so a 1e-3
    # tolerance is comfortable (10x tighter than the previous version).
    if not np.allclose(np.asarray(offset), np.asarray(ref), rtol=1e-3, atol=1e-3):
        max_err = float(np.max(np.abs(np.asarray(offset) - np.asarray(ref))))
        raise AssertionError(f"mismatch vs reference, max abs err = {max_err}")

    print("KERNEL_OK")
</pallas_src>

<mosaic_0001>
module attributes {stable_mosaic.version = 11 : i64} {
  func.func @fused_offset_kernel(%arg0: memref<64x128xf32, #tpu.memory_space<vmem>>, %arg1: memref<24x128xf32, #tpu.memory_space<vmem>>, %arg2: memref<4x128xf32, #tpu.memory_space<vmem>>) attributes {dimension_semantics = [], scalar_prefetch = 0 : i64, scratch_operands = 0 : i64, tpu.core_type = #tpu.core_type<tc>} {
    %c0 = arith.constant 0 : index
    %c0_0 = arith.constant 0 : index
    %0 = vector.load %arg0[%c0, %c0_0] : memref<64x128xf32, #tpu.memory_space<vmem>>, vector<64x128xf32>
    %c0_1 = arith.constant 0 : index
    %c0_2 = arith.constant 0 : index
    %1 = vector.load %arg1[%c0_1, %c0_2] : memref<24x128xf32, #tpu.memory_space<vmem>>, vector<16x64xf32>
    %c0_3 = arith.constant 0 : index
    %c64 = arith.constant 64 : index
    %2 = vector.load %arg1[%c0_3, %c64] : memref<24x128xf32, #tpu.memory_space<vmem>>, vector<16x1xf32>
    %c0_4 = arith.constant 0 : index
    %c65 = arith.constant 65 : index
    %3 = vector.load %arg1[%c0_4, %c65] : memref<24x128xf32, #tpu.memory_space<vmem>>, vector<16x1xf32>
    %c0_5 = arith.constant 0 : index
    %c66 = arith.constant 66 : index
    %4 = vector.load %arg1[%c0_5, %c66] : memref<24x128xf32, #tpu.memory_space<vmem>>, vector<16x1xf32>
    %c16 = arith.constant 16 : index
    %c0_6 = arith.constant 0 : index
    %5 = vector.load %arg1[%c16, %c0_6] : memref<24x128xf32, #tpu.memory_space<vmem>>, vector<4x16xf32>
    %cst = arith.constant dense<0.000000e+00> : vector<16x128xf32>
    %6 = tpu.matmul %1, %0, %cst {dimension_numbers = #tpu.dot_dimension_numbers<[1], [0], [0], [1], [0, 0, 1, 1], [], []>, precision = #tpu.contract_precision<fp32>} : vector<16x64xf32>, vector<64x128xf32>, vector<16x128xf32> -> vector<16x128xf32>
    %7 = vector.broadcast %2 : vector<16x1xf32> to vector<16x128xf32>
    %8 = arith.addf %6, %7 : vector<16x128xf32>
    %9 = vector.extract_strided_slice %8 {offsets = [0, 0], sizes = [8, 128], strides = [1, 1]} : vector<16x128xf32> to vector<8x128xf32>
    %cst_7 = arith.constant dense<0.000000e+00> : vector<128xf32>
    %10 = vector.multi_reduction <add>, %9, %cst_7 [0] : vector<8x128xf32> to vector<128xf32>
    %11 = vector.shape_cast %10 : vector<128xf32> to vector<1x128xf32>
    %cst_8 = arith.constant 8.000000e+00 : f32
    %12 = vector.broadcast %cst_8 : f32 to vector<1x128xf32>
    %13 = arith.divf %11, %12 : vector<1x128xf32>
    %14 = vector.broadcast %13 : vector<1x128xf32> to vector<8x128xf32>
    %15 = arith.subf %9, %14 : vector<8x128xf32>
    %16 = vector.broadcast %13 : vector<1x128xf32> to vector<8x128xf32>
    %17 = arith.subf %9, %16 : vector<8x128xf32>
    %18 = arith.mulf %15, %17 : vector<8x128xf32>
    %cst_9 = arith.constant dense<0.000000e+00> : vector<128xf32>
    %19 = vector.multi_reduction <add>, %18, %cst_9 [0] : vector<8x128xf32> to vector<128xf32>
    %20 = vector.shape_cast %19 : vector<128xf32> to vector<1x128xf32>
    %cst_10 = arith.constant 8.000000e+00 : f32
    %21 = vector.broadcast %cst_10 : f32 to vector<1x128xf32>
    %22 = arith.divf %20, %21 : vector<1x128xf32>
    %23 = vector.broadcast %13 : vector<1x128xf32> to vector<8x128xf32>
    %24 = arith.subf %9, %23 : vector<8x128xf32>
    %cst_11 = arith.constant 9.99999974E-6 : f32
    %25 = vector.broadcast %cst_11 : f32 to vector<1x128xf32>
    %26 = arith.addf %22, %25 : vector<1x128xf32>
    %27 = math.rsqrt %26 : vector<1x128xf32>
    %28 = vector.broadcast %27 : vector<1x128xf32> to vector<8x128xf32>
    %29 = arith.mulf %24, %28 : vector<8x128xf32>
    %30 = vector.extract_strided_slice %8 {offsets = [8, 0], sizes = [8, 128], strides = [1, 1]} : vector<16x128xf32> to vector<8x128xf32>
    %cst_12 = arith.constant dense<0.000000e+00> : vector<128xf32>
    %31 = vector.multi_reduction <add>, %30, %cst_12 [0] : vector<8x128xf32> to vector<128xf32>
    %32 = vector.shape_cast %31 : vector<128xf32> to vector<1x128xf32>
    %cst_13 = arith.constant 8.000000e+00 : f32
    %33 = vector.broadcast %cst_13 : f32 to vector<1x128xf32>
    %34 = arith.divf %32, %33 : vector<1x128xf32>
    %35 = vector.broadcast %34 : vector<1x128xf32> to vector<8x128xf32>
    %36 = arith.subf %30, %35 : vector<8x128xf32>
    %37 = vector.broadcast %34 : vector<1x128xf32> to vector<8x128xf32>
    %38 = arith.subf %30, %37 : vector<8x128xf32>
    %39 = arith.mulf %36, %38 : vector<8x128xf32>
    %cst_14 = arith.constant dense<0.000000e+00> : vector<128xf32>
    %40 = vector.multi_reduction <add>, %39, %cst_14 [0] : vector<8x128xf32> to vector<128xf32>
    %41 = vector.shape_cast %40 : vector<128xf32> to vector<1x128xf32>
    %cst_15 = arith.constant 8.000000e+00 : f32
    %42 = vector.broadcast %cst_15 : f32 to vector<1x128xf32>
    %43 = arith.divf %41, %42 : vector<1x128xf32>
    %44 = vector.broadcast %34 : vector<1x128xf32> to vector<8x128xf32>
    %45 = arith.subf %30, %44 : vector<8x128xf32>
    %cst_16 = arith.constant 9.99999974E-6 : f32
    %46 = vector.broadcast %cst_16 : f32 to vector<1x128xf32>
    %47 = arith.addf %43, %46 : vector<1x128xf32>
    %48 = math.rsqrt %47 : vector<1x128xf32>
    %49 = vector.broadcast %48 : vector<1x128xf32> to vector<8x128xf32>
    %50 = arith.mulf %45, %49 : vector<8x128xf32>
    %51 = tpu.concatenate %29, %50 in 0 : vector<8x128xf32>, vector<8x128xf32> -> vector<16x128xf32>
    %52 = vector.broadcast %3 : vector<16x1xf32> to vector<16x128xf32>
    %53 = arith.mulf %51, %52 : vector<16x128xf32>
    %54 = vector.broadcast %4 : vector<16x1xf32> to vector<16x128xf32>
    %55 = arith.addf %53, %54 : vector<16x128xf32>
    %cst_17 = arith.constant 5.000000e-01 : f32
    %56 = vector.broadcast %cst_17 : f32 to vector<16x128xf32>
    %57 = arith.mulf %56, %55 : vector<16x128xf32>
    %cst_18 = arith.constant 0.707106769 : f32
    %58 = vector.broadcast %cst_18 : f32 to vector<16x128xf32>
    %59 = arith.mulf %55, %58 : vector<16x128xf32>
    %cst_19 = arith.constant 0.000000e+00 : f32
    %60 = vector.broadcast %cst_19 : f32 to vector<16x128xf32>
    %61 = arith.cmpf oge, %59, %60 : vector<16x128xf32>
    %cst_20 = arith.constant 1.000000e+00 : f32
    %cst_21 = arith.constant -1.000000e+00 : f32
    %62 = vector.broadcast %cst_20 : f32 to vector<16x128xf32>
    %63 = vector.broadcast %cst_21 : f32 to vector<16x128xf32>
    %64 = arith.select %61, %62, %63 : vector<16x128xi1>, vector<16x128xf32>
    %65 = math.absf %59 : vector<16x128xf32>
    %cst_22 = arith.constant 0.327591091 : f32
    %66 = vector.broadcast %cst_22 : f32 to vector<16x128xf32>
    %67 = arith.mulf %66, %65 : vector<16x128xf32>
    %cst_23 = arith.constant 1.000000e+00 : f32
    %68 = vector.broadcast %cst_23 : f32 to vector<16x128xf32>
    %69 = arith.addf %68, %67 : vector<16x128xf32>
    %70 = tpu.reciprocal %69 {approx = true} : vector<16x128xf32> -> vector<16x128xf32>
    %71 = arith.mulf %69, %70 : vector<16x128xf32>
    %cst_24 = arith.constant 2.000000e+00 : f32
    %72 = vector.broadcast %cst_24 : f32 to vector<16x128xf32>
    %73 = arith.subf %72, %71 : vector<16x128xf32>
    %74 = arith.mulf %70, %73 : vector<16x128xf32>
    %cst_25 = arith.constant 1.06140542 : f32
    %75 = vector.broadcast %cst_25 : f32 to vector<16x128xf32>
    %76 = arith.mulf %75, %74 : vector<16x128xf32>
    %cst_26 = arith.constant -1.45315206 : f32
    %77 = vector.broadcast %cst_26 : f32 to vector<16x128xf32>
    %78 = arith.addf %76, %77 : vector<16x128xf32>
    %79 = arith.mulf %78, %74 : vector<16x128xf32>
    %cst_27 = arith.constant 1.42141378 : f32
    %80 = vector.broadcast %cst_27 : f32 to vector<16x128xf32>
    %81 = arith.addf %79, %80 : vector<16x128xf32>
    %82 = arith.mulf %81, %74 : vector<16x128xf32>
    %cst_28 = arith.constant -0.284496725 : f32
    %83 = vector.broadcast %cst_28 : f32 to vector<16x128xf32>
    %84 = arith.addf %82, %83 : vector<16x128xf32>
    %85 = arith.mulf %84, %74 : vector<16x128xf32>
    %cst_29 = arith.constant 0.254829586 : f32
    %86 = vector.broadcast %cst_29 : f32 to vector<16x128xf32>
    %87 = arith.addf %85, %86 : vector<16x128xf32>
    %88 = arith.mulf %87, %74 : vector<16x128xf32>
    %cst_30 = arith.constant 0.000000e+00 : f32
    %89 = vector.broadcast %cst_30 : f32 to vector<16x128xf32>
    %90 = arith.subf %89, %65 : vector<16x128xf32>
    %91 = arith.mulf %90, %65 : vector<16x128xf32>
    %92 = math.exp %91 : vector<16x128xf32>
    %93 = arith.mulf %88, %92 : vector<16x128xf32>
    %cst_31 = arith.constant 1.000000e+00 : f32
    %94 = vector.broadcast %cst_31 : f32 to vector<16x128xf32>
    %95 = arith.subf %94, %93 : vector<16x128xf32>
    %96 = arith.mulf %64, %95 : vector<16x128xf32>
    %cst_32 = arith.constant 1.000000e+00 : f32
    %97 = vector.broadcast %cst_32 : f32 to vector<16x128xf32>
    %98 = arith.addf %97, %96 : vector<16x128xf32>
    %99 = arith.mulf %57, %98 : vector<16x128xf32>
    %cst_33 = arith.constant dense<0.000000e+00> : vector<4x128xf32>
    %100 = tpu.matmul %5, %99, %cst_33 {dimension_numbers = #tpu.dot_dimension_numbers<[1], [0], [0], [1], [0, 0, 1, 1], [], []>, precision = #tpu.contract_precision<fp32>} : vector<4x16xf32>, vector<16x128xf32>, vector<4x128xf32> -> vector<4x128xf32>
    %c0_34 = arith.constant 0 : index
    %c0_35 = arith.constant 0 : index
    %101 = vector.load %arg2[%c0_34, %c0_35] : memref<4x128xf32, #tpu.memory_space<vmem>>, vector<4x128xf32>
    tpu.vector_store %arg2[%c0_34, %c0_35], %100 {strides = array<i32>} : memref<4x128xf32, #tpu.memory_space<vmem>>, vector<4x128xf32>,
    return
  }
}

</mosaic_0001>

<llo_original>
// kernel: dat_forward.1
$region0: #{dat_forward.1}
  #allocation0 [shape = 'u32[]', space=smem, size = 0x4, offset = 0x4, fixed_abs, tag = 'smem constant byte address 0x4 - core index']
  #allocation1 [shape = 'u32[144,128]{1,0:T(1,128)}', space=vmem, size = 0x12000, scoped, tag = 'internal scratch']
  %s0 = inlined_call_operand.vmem [shape: f32[64,128], index: 0, kind: input, shape index: {}]
  %s1 = inlined_call_operand.vmem [shape: f32[24,128], index: 1, kind: input, shape index: {}]
  %s2 = inlined_call_operand.vmem [shape: f32[4,128], index: 2, kind: output, shape index: {}]
  %s3 = sld [smem:[#allocation0]]
  $region18: #{dat_forward.1} parent=0
    _
  %s5 = ssub.s32 1, %s3
  %s6 = scalar_select 0, %s5, %s3
  // Predicated region
  $region2: #{dat_forward.1} parent=0 // pred_check
    _
  $region3: #{dat_forward.1} parent=0 // pred_check_branch
    %8 = sbr.rel (0) target = $region5
  $region4: #{dat_forward.1} parent=0 // pred_region
    _
  $region5: #{dat_forward.1} parent=0 // pred_fallthru
    _
  // Predicated region
  $region6: #{dat_forward.1} parent=0 // pred_check
    _
  $region7: #{dat_forward.1} parent=0 // pred_check_branch
    %10 = sbr.rel (0) target = $region9
  $region8: #{dat_forward.1} parent=0 // pred_region
    _
  $region9: #{dat_forward.1} parent=0 // pred_fallthru
    _
  %v11 = vld [vmem:[%s0] sm:$0xff]
  %v12 = vld [vmem:[%s0 + $0x8] sm:$0xff]
  %v13 = vld [vmem:[%s0 + $0x10] sm:$0xff]
  %v14 = vld [vmem:[%s0 + $0x18] sm:$0xff]
  %v15 = vld [vmem:[%s0 + $0x20] sm:$0xff]
  %v16 = vld [vmem:[%s0 + $0x28] sm:$0xff]
  %v17 = vld [vmem:[%s0 + $0x30] sm:$0xff]
  %v18 = vld [vmem:[%s0 + $0x38] sm:$0xff]
  %v19 = vld [vmem:[%s1] sm:$0xff]
  %v20 = vld [vmem:[%s1 + $0x8] sm:$0xff]
  %v21 = vld [vmem:[%s1 + $0x10] sm:$0xf]
  %23 = vset.pattern.permute.xlu0 64
  %24 = vperm.xlu0 %23, %v19
  %v25 = vpop.permute.xlu0 %24
  %28 = vset.pattern.permute.xlu0 64
  %29 = vperm.xlu0 %28, %v20
  %v30 = vpop.permute.xlu0 %29
  %vm32 = vcmask 523264
  %v33 = vsel %vm32, %v19, 0
  %v35 = vsel %vm32, %v20, 0
  %37 = vmatprep.subr.mxu0 0.0
  %v38 = vand.u32 %v11, 4294901760
  %39 = vmatpush1.msra.mxu0 %v38
  %40 = vmatprep.subr.mxu0 0.0
  %v41 = vand.u32 %v12, 4294901760
  %42 = vmatpush1.msra.mxu0 %v41
  %43 = vmatprep.subr.mxu0 0.0
  %v44 = vand.u32 %v13, 4294901760
  %45 = vmatpush1.msra.mxu0 %v44
  %46 = vmatprep.subr.mxu0 0.0
  %v47 = vand.u32 %v14, 4294901760
  %48 = vmatpush1.msra.mxu0 %v47
  %49 = vmatprep.subr.mxu0 0.0
  %v50 = vand.u32 %v15, 4294901760
  %51 = vmatpush1.msra.mxu0 %v50
  %52 = vmatprep.subr.mxu0 0.0
  %v53 = vand.u32 %v16, 4294901760
  %54 = vmatpush1.msra.mxu0 %v53
  %55 = vmatprep.subr.mxu0 0.0
  %v56 = vand.u32 %v17, 4294901760
  %57 = vmatpush1.msra.mxu0 %v56
  %58 = vmatprep.subr.mxu0 0.0
  %v59 = vand.u32 %v18, 4294901760
  %60 = vmatpush1.msra.mxu0 %v59
  %61 = vmatprep.subr.mxu0 0.0
  %62 = vmatpush1.msra.mxu0 0.0
  %63 = vmatprep.subr.mxu0 0.0
  %64 = vmatpush1.msra.mxu0 0.0
  %65 = vmatprep.subr.mxu0 0.0
  %66 = vmatpush1.msra.mxu0 0.0
  %67 = vmatprep.subr.mxu0 0.0
  %68 = vmatpush1.msra.mxu0 0.0
  %69 = vmatprep.subr.mxu0 0.0
  %70 = vmatpush1.msra.mxu0 0.0
  %71 = vmatprep.subr.mxu0 0.0
  %72 = vmatpush1.msra.mxu0 0.0
  %73 = vmatprep.subr.mxu0 0.0
  %74 = vmatpush1.msra.mxu0 0.0
  %75 = vmatprep.subr.mxu0 0.0
  %76 = vmatpush1.msra.mxu0 0.0
  %77 = vmatprep.subr.mxu0 0.0
  %78 = vmatpush1.msra.mxu0 0.0
  %79 = vmatprep.subr.mxu0 0.0
  %80 = vmatpush1.msra.mxu0 0.0
  %81 = vmatprep.subr.mxu0 0.0
  %82 = vmatpush1.msra.mxu0 0.0
  %83 = vmatprep.subr.mxu0 0.0
  %84 = vmatpush1.msra.mxu0 0.0
  %85 = vmatprep.subr.mxu0 0.0
  %86 = vmatpush1.msra.mxu0 0.0
  %87 = vmatprep.subr.mxu0 0.0
  %88 = vmatpush1.msra.mxu0 0.0
  %89 = vmatprep.subr.mxu0 0.0
  %90 = vmatpush1.msra.mxu0 0.0
  %91 = vmatprep.subr.mxu0 0.0
  %92 = vmatpush1.msra.mxu0 0.0
  %93 = vmatprep.subr.mxu0 0.0
  %94 = vmatpush1.msra.mxu0 0.0
  %95 = vmatprep.subr.mxu0 0.0
  %96 = vmatpush1.msra.mxu0 0.0
  %97 = vmatprep.subr.mxu0 0.0
  %98 = vmatpush1.msra.mxu0 0.0
  %99 = vmatprep.subr.mxu0 0.0
  %100 = vmatpush1.msra.mxu0 0.0
  %101 = vmatprep.subr.mxu0 0.0
  %102 = vmatpush1.msra.mxu0 0.0
  %103 = vmatprep.subr.mxu0 0.0
  %104 = vmatpush1.msra.mxu0 0.0
  %105 = vmatprep.subr.mxu0 0.0
  %106 = vmatpush1.msra.mxu0 0.0
  %107 = vmatprep.subr.mxu0 0.0
  %108 = vmatpush1.msra.mxu0 0.0
  %109 = vmatprep.mubr.f32.mxu0 0.0
  %v110 = vand.u32 %v33, 4294901760
  %v111 = vsub.f32 %v33, %v110
  %v112 = vand.u32 %v111, 4294901760
  %v113 = vsub.f32 %v111, %v112
  %v114 = vand.u32 %v113, 4294901760
  %115 = vmatmul.mubr.f32.gmra.mrb[0].mxu0 %v114
  %v116 = vpop.f32.mrb[0].mxu0
  %v117 = vadd.f32 %v25, %v116
  %v118 = vpop.f32.mrb[0].mxu0
  %119 = vmatprep.mubr.f32.mxu0 0.0
  %v120 = vand.u32 %v35, 4294901760
  %v121 = vsub.f32 %v35, %v120
  %v122 = vand.u32 %v121, 4294901760
  %v123 = vsub.f32 %v121, %v122
  %v124 = vand.u32 %v123, 4294901760
  %125 = vmatmul.mubr.f32.gmra.mrb[0].mxu0 %v124
  %v126 = vpop.f32.mrb[0].mxu0
  %v127 = vadd.f32 %v30, %v126
  %v128 = vpop.f32.mrb[0].mxu0
  %129 = vdwg.mxu0
  %130 = vmatprep.subr.mxu0 0.0
  %v131 = vand.u32 %v11, 4294901760
  %v132 = vsub.f32 %v11, %v131
  %v133 = vand.u32 %v132, 4294901760
  %v134 = vsub.f32 %v132, %v133
  %v135 = vand.u32 %v134, 4294901760
  %136 = vmatpush1.msra.mxu0 %v135
  %137 = vmatprep.subr.mxu0 0.0
  %v138 = vand.u32 %v12, 4294901760
  %v139 = vsub.f32 %v12, %v138
  %v140 = vand.u32 %v139, 4294901760
  %v141 = vsub.f32 %v139, %v140
  %v142 = vand.u32 %v141, 4294901760
  %143 = vmatpush1.msra.mxu0 %v142
  %144 = vmatprep.subr.mxu0 0.0
  %v145 = vand.u32 %v13, 4294901760
  %v146 = vsub.f32 %v13, %v145
  %v147 = vand.u32 %v146, 4294901760
  %v148 = vsub.f32 %v146, %v147
  %v149 = vand.u32 %v148, 4294901760
  %150 = vmatpush1.msra.mxu0 %v149
  %151 = vmatprep.subr.mxu0 0.0
  %v152 = vand.u32 %v14, 4294901760
  %v153 = vsub.f32 %v14, %v152
  %v154 = vand.u32 %v153, 4294901760
  %v155 = vsub.f32 %v153, %v154
  %v156 = vand.u32 %v155, 4294901760
  %157 = vmatpush1.msra.mxu0 %v156
  %158 = vmatprep.subr.mxu0 0.0
  %v159 = vand.u32 %v15, 4294901760
  %v160 = vsub.f32 %v15, %v159
  %v161 = vand.u32 %v160, 4294901760
  %v162 = vsub.f32 %v160, %v161
  %v163 = vand.u32 %v162, 4294901760
  %164 = vmatpush1.msra.mxu0 %v163
  %165 = vmatprep.subr.mxu0 0.0
  %v166 = vand.u32 %v16, 4294901760
  %v167 = vsub.f32 %v16, %v166
  %v168 = vand.u32 %v167, 4294901760
  %v169 = vsub.f32 %v167, %v168
  %v170 = vand.u32 %v169, 4294901760
  %171 = vmatpush1.msra.mxu0 %v170
  %172 = vmatprep.subr.mxu0 0.0
  %v173 = vand.u32 %v17, 4294901760
  %v174 = vsub.f32 %v17, %v173
  %v175 = vand.u32 %v174, 4294901760
  %v176 = vsub.f32 %v174, %v175
  %v177 = vand.u32 %v176, 4294901760
  %178 = vmatpush1.msra.mxu0 %v177
  %179 = vmatprep.subr.mxu0 0.0
  %v180 = vand.u32 %v18, 4294901760
  %v181 = vsub.f32 %v18, %v180
  %v182 = vand.u32 %v181, 4294901760
  %v183 = vsub.f32 %v181, %v182
  %v184 = vand.u32 %v183, 4294901760
  %185 = vmatpush1.msra.mxu0 %v184
  %186 = vmatprep.subr.mxu0 0.0
  %187 = vmatpush1.msra.mxu0 0.0
  %188 = vmatprep.subr.mxu0 0.0
  %189 = vmatpush1.msra.mxu0 0.0
  %190 = vmatprep.subr.mxu0 0.0
  %191 = vmatpush1.msra.mxu0 0.0
  %192 = vmatprep.subr.mxu0 0.0
  %193 = vmatpush1.msra.mxu0 0.0
  %194 = vmatprep.subr.mxu0 0.0
  %195 = vmatpush1.msra.mxu0 0.0
  %196 = vmatprep.subr.mxu0 0.0
  %197 = vmatpush1.msra.mxu0 0.0
  %198 = vmatprep.subr.mxu0 0.0
  %199 = vmatpush1.msra.mxu0 0.0
  %200 = vmatprep.subr.mxu0 0.0
  %201 = vmatpush1.msra.mxu0 0.0
  %202 = vmatprep.subr.mxu0 0.0
  %203 = vmatpush1.msra.mxu0 0.0
  %204 = vmatprep.subr.mxu0 0.0
  %205 = vmatpush1.msra.mxu0 0.0
  %206 = vmatprep.subr.mxu0 0.0
  %207 = vmatpush1.msra.mxu0 0.0
  %208 = vmatprep.subr.mxu0 0.0
  %209 = vmatpush1.msra.mxu0 0.0
  %210 = vmatprep.subr.mxu0 0.0
  %211 = vmatpush1.msra.mxu0 0.0
  %212 = vmatprep.subr.mxu0 0.0
  %213 = vmatpush1.msra.mxu0 0.0
  %214 = vmatprep.subr.mxu0 0.0
  %215 = vmatpush1.msra.mxu0 0.0
  %216 = vmatprep.subr.mxu0 0.0
  %217 = vmatpush1.msra.mxu0 0.0
  %218 = vmatprep.subr.mxu0 0.0
  %219 = vmatpush1.msra.mxu0 0.0
  %220 = vmatprep.subr.mxu0 0.0
  %221 = vmatpush1.msra.mxu0 0.0
  %222 = vmatprep.subr.mxu0 0.0
  %223 = vmatpush1.msra.mxu0 0.0
  %224 = vmatprep.subr.mxu0 0.0
  %225 = vmatpush1.msra.mxu0 0.0
  %226 = vmatprep.subr.mxu0 0.0
  %227 = vmatpush1.msra.mxu0 0.0
  %228 = vmatprep.subr.mxu0 0.0
  %229 = vmatpush1.msra.mxu0 0.0
  %230 = vmatprep.subr.mxu0 0.0
  %231 = vmatpush1.msra.mxu0 0.0
  %232 = vmatprep.subr.mxu0 0.0
  %233 = vmatpush1.msra.mxu0 0.0
  %234 = vmatprep.mubr.f32.mxu0 0.0
  %v235 = vand.u32 %v33, 4294901760
  %236 = vmatmul.mubr.f32.gmra.mrb[0].mxu0 %v235
  %v237 = vpop.f32.mrb[0].mxu0
  %v238 = vadd.f32 %v117, %v237
  %v239 = vpop.f32.mrb[0].mxu0
  %240 = vmatprep.mubr.f32.mxu0 0.0
  %v241 = vand.u32 %v35, 4294901760
  %242 = vmatmul.mubr.f32.gmra.mrb[0].mxu0 %v241
  %v243 = vpop.f32.mrb[0].mxu0
  %v244 = vadd.f32 %v127, %v243
  %v245 = vpop.f32.mrb[0].mxu0
  %246 = vdwg.mxu0
  %247 = vmatprep.subr.mxu0 0.0
  %v248 = vand.u32 %v11, 4294901760
  %v249 = vsub.f32 %v11, %v248
  %250 = vmatpush1.msra.mxu0 %v249
  %251 = vmatprep.subr.mxu0 0.0
  %v252 = vand.u32 %v12, 4294901760
  %v253 = vsub.f32 %v12, %v252
  %254 = vmatpush1.msra.mxu0 %v253
  %255 = vmatprep.subr.mxu0 0.0
  %v256 = vand.u32 %v13, 4294901760
  %v257 = vsub.f32 %v13, %v256
  %258 = vmatpush1.msra.mxu0 %v257
  %259 = vmatprep.subr.mxu0 0.0
  %v260 = vand.u32 %v14, 4294901760
  %v261 = vsub.f32 %v14, %v260
  %262 = vmatpush1.msra.mxu0 %v261
  %263 = vmatprep.subr.mxu0 0.0
  %v264 = vand.u32 %v15, 4294901760
  %v265 = vsub.f32 %v15, %v264
  %266 = vmatpush1.msra.mxu0 %v265
  %267 = vmatprep.subr.mxu0 0.0
  %v268 = vand.u32 %v16, 4294901760
  %v269 = vsub.f32 %v16, %v268
  %270 = vmatpush1.msra.mxu0 %v269
  %271 = vmatprep.subr.mxu0 0.0
  %v272 = vand.u32 %v17, 4294901760
  %v273 = vsub.f32 %v17, %v272
  %274 = vmatpush1.msra.mxu0 %v273
  %275 = vmatprep.subr.mxu0 0.0
  %v276 = vand.u32 %v18, 4294901760
  %v277 = vsub.f32 %v18, %v276
  %278 = vmatpush1.msra.mxu0 %v277
  %279 = vmatprep.subr.mxu0 0.0
  %280 = vmatpush1.msra.mxu0 0.0
  %281 = vmatprep.subr.mxu0 0.0
  %282 = vmatpush1.msra.mxu0 0.0
  %283 = vmatprep.subr.mxu0 0.0
  %284 = vmatpush1.msra.mxu0 0.0
  %285 = vmatprep.subr.mxu0 0.0
  %286 = vmatpush1.msra.mxu0 0.0
  %287 = vmatprep.subr.mxu0 0.0
  %288 = vmatpush1.msra.mxu0 0.0
  %289 = vmatprep.subr.mxu0 0.0
  %290 = vmatpush1.msra.mxu0 0.0
  %291 = vmatprep.subr.mxu0 0.0
  %292 = vmatpush1.msra.mxu0 0.0
  %293 = vmatprep.subr.mxu0 0.0
  %294 = vmatpush1.msra.mxu0 0.0
  %295 = vmatprep.subr.mxu0 0.0
  %296 = vmatpush1.msra.mxu0 0.0
  %297 = vmatprep.subr.mxu0 0.0
  %298 = vmatpush1.msra.mxu0 0.0
  %299 = vmatprep.subr.mxu0 0.0
  %300 = vmatpush1.msra.mxu0 0.0
  %301 = vmatprep.subr.mxu0 0.0
  %302 = vmatpush1.msra.mxu0 0.0
  %303 = vmatprep.subr.mxu0 0.0
  %304 = vmatpush1.msra.mxu0 0.0
  %305 = vmatprep.subr.mxu0 0.0
  %306 = vmatpush1.msra.mxu0 0.0
  %307 = vmatprep.subr.mxu0 0.0
  %308 = vmatpush1.msra.mxu0 0.0
  %309 = vmatprep.subr.mxu0 0.0
  %310 = vmatpush1.msra.mxu0 0.0
  %311 = vmatprep.subr.mxu0 0.0
  %312 = vmatpush1.msra.mxu0 0.0
  %313 = vmatprep.subr.mxu0 0.0
  %314 = vmatpush1.msra.mxu0 0.0
  %315 = vmatprep.subr.mxu0 0.0
  %316 = vmatpush1.msra.mxu0 0.0
  %317 = vmatprep.subr.mxu0 0.0
  %318 = vmatpush1.msra.mxu0 0.0
  %319 = vmatprep.subr.mxu0 0.0
  %320 = vmatpush1.msra.mxu0 0.0
  %321 = vmatprep.subr.mxu0 0.0
  %322 = vmatpush1.msra.mxu0 0.0
  %323 = vmatprep.subr.mxu0 0.0
  %324 = vmatpush1.msra.mxu0 0.0
  %325 = vmatprep.subr.mxu0 0.0
  %326 = vmatpush1.msra.mxu0 0.0
  %327 = vmatprep.mubr.f32.mxu0 0.0
  %v328 = vand.u32 %v33, 4294901760
  %v329 = vsub.f32 %v33, %v328
  %330 = vmatmul.mubr.f32.gmra.mrb[0].mxu0 %v329
  %v331 = vpop.f32.mrb[0].mxu0
  %v332 = vadd.f32 %v238, %v331
  %v333 = vpop.f32.mrb[0].mxu0
  %334 = vmatprep.mubr.f32.mxu0 0.0
  %v335 = vand.u32 %v35, 4294901760
  %v336 = vsub.f32 %v35, %v335
  %337 = vmatmul.mubr.f32.gmra.mrb[0].mxu0 %v336
  %v338 = vpop.f32.mrb[0].mxu0
  %v339 = vadd.f32 %v244, %v338
  %v340 = vpop.f32.mrb[0].mxu0
  %341 = vdwg.mxu0
  %342 = vmatprep.subr.mxu0 0.0
  %v343 = vand.u32 %v11, 4294901760
  %344 = vmatpush1.msra.mxu0 %v343
  %345 = vmatprep.subr.mxu0 0.0
  %v346 = vand.u32 %v12, 4294901760
  %347 = vmatpush1.msra.mxu0 %v346
  %348 = vmatprep.subr.mxu0 0.0
  %v349 = vand.u32 %v13, 4294901760
  %350 = vmatpush1.msra.mxu0 %v349
  %351 = vmatprep.subr.mxu0 0.0
  %v352 = vand.u32 %v14, 4294901760
  %353 = vmatpush1.msra.mxu0 %v352
  %354 = vmatprep.subr.mxu0 0.0
  %v355 = vand.u32 %v15, 4294901760
  %356 = vmatpush1.msra.mxu0 %v355
  %357 = vmatprep.subr.mxu0 0.0
  %v358 = vand.u32 %v16, 4294901760
  %359 = vmatpush1.msra.mxu0 %v358
  %360 = vmatprep.subr.mxu0 0.0
  %v361 = vand.u32 %v17, 4294901760
  %362 = vmatpush1.msra.mxu0 %v361
  %363 = vmatprep.subr.mxu0 0.0
  %v364 = vand.u32 %v18, 4294901760
  %365 = vmatpush1.msra.mxu0 %v364
  %366 = vmatprep.subr.mxu0 0.0
  %367 = vmatpush1.msra.mxu0 0.0
  %368 = vmatprep.subr.mxu0 0.0
  %369 = vmatpush1.msra.mxu0 0.0
  %370 = vmatprep.subr.mxu0 0.0
  %371 = vmatpush1.msra.mxu0 0.0
  %372 = vmatprep.subr.mxu0 0.0
  %373 = vmatpush1.msra.mxu0 0.0
  %374 = vmatprep.subr.mxu0 0.0
  %375 = vmatpush1.msra.mxu0 0.0
  %376 = vmatprep.subr.mxu0 0.0
  %377 = vmatpush1.msra.mxu0 0.0
  %378 = vmatprep.subr.mxu0 0.0
  %379 = vmatpush1.msra.mxu0 0.0
  %380 = vmatprep.subr.mxu0 0.0
  %381 = vmatpush1.msra.mxu0 0.0
  %382 = vmatprep.subr.mxu0 0.0
  %383 = vmatpush1.msra.mxu0 0.0
  %384 = vmatprep.subr.mxu0 0.0
  %385 = vmatpush1.msra.mxu0 0.0
  %386 = vmatprep.subr.mxu0 0.0
  %387 = vmatpush1.msra.mxu0 0.0
  %388 = vmatprep.subr.mxu0 0.0
  %389 = vmatpush1.msra.mxu0 0.0
  %390 = vmatprep.subr.mxu0 0.0
  %391 = vmatpush1.msra.mxu0 0.0
  %392 = vmatprep.subr.mxu0 0.0
  %393 = vmatpush1.msra.mxu0 0.0
  %394 = vmatprep.subr.mxu0 0.0
  %395 = vmatpush1.msra.mxu0 0.0
  %396 = vmatprep.subr.mxu0 0.0
  %397 = vmatpush1.msra.mxu0 0.0
  %398 = vmatprep.subr.mxu0 0.0
  %399 = vmatpush1.msra.mxu0 0.0
  %400 = vmatprep.subr.mxu0 0.0
  %401 = vmatpush1.msra.mxu0 0.0
  %402 = vmatprep.subr.mxu0 0.0
  %403 = vmatpush1.msra.mxu0 0.0
  %404 = vmatprep.subr.mxu0 0.0
  %405 = vmatpush1.msra.mxu0 0.0
  %406 = vmatprep.subr.mxu0 0.0
  %407 = vmatpush1.msra.mxu0 0.0
  %408 = vmatprep.subr.mxu0 0.0
  %409 = vmatpush1.msra.mxu0 0.0
  %410 = vmatprep.subr.mxu0 0.0
  %411 = vmatpush1.msra.mxu0 0.0
  %412 = vmatprep.subr.mxu0 0.0
  %413 = vmatpush1.msra.mxu0 0.0
  %414 = vmatprep.mubr.f32.mxu0 0.0
  %v415 = vand.u32 %v33, 4294901760
  %v416 = vsub.f32 %v33, %v415
  %v417 = vand.u32 %v416, 4294901760
  %418 = vmatmul.mubr.f32.gmra.mrb[0].mxu0 %v417
  %v419 = vpop.f32.mrb[0].mxu0
  %v420 = vadd.f32 %v332, %v419
  %v421 = vpop.f32.mrb[0].mxu0
  %422 = vmatprep.mubr.f32.mxu0 0.0
  %v423 = vand.u32 %v35, 4294901760
  %v424 = vsub.f32 %v35, %v423
  %v425 = vand.u32 %v424, 4294901760
  %426 = vmatmul.mubr.f32.gmra.mrb[0].mxu0 %v425
  %v427 = vpop.f32.mrb[0].mxu0
  %v428 = vadd.f32 %v339, %v427
  %v429 = vpop.f32.mrb[0].mxu0
  %430 = vdwg.mxu0
  %431 = vmatprep.subr.mxu0 0.0
  %v432 = vand.u32 %v11, 4294901760
  %v433 = vsub.f32 %v11, %v432
  %v434 = vand.u32 %v433, 4294901760
  %435 = vmatpush1.msra.mxu0 %v434
  %436 = vmatprep.subr.mxu0 0.0
  %v437 = vand.u32 %v12, 4294901760
  %v438 = vsub.f32 %v12, %v437
  %v439 = vand.u32 %v438, 4294901760
  %440 = vmatpush1.msra.mxu0 %v439
  %441 = vmatprep.subr.mxu0 0.0
  %v442 = vand.u32 %v13, 4294901760
  %v443 = vsub.f32 %v13, %v442
  %v444 = vand.u32 %v443, 4294901760
  %445 = vmatpush1.msra.mxu0 %v444
  %446 = vmatprep.subr.mxu0 0.0
  %v447 = vand.u32 %v14, 4294901760
  %v448 = vsub.f32 %v14, %v447
  %v449 = vand.u32 %v448, 4294901760
  %450 = vmatpush1.msra.mxu0 %v449
  %451 = vmatprep.subr.mxu0 0.0
  %v452 = vand.u32 %v15, 4294901760
  %v453 = vsub.f32 %v15, %v452
  %v454 = vand.u32 %v453, 4294901760
  %455 = vmatpush1.msra.mxu0 %v454
  %456 = vmatprep.subr.mxu0 0.0
  %v457 = vand.u32 %v16, 4294901760
  %v458 = vsub.f32 %v16, %v457
  %v459 = vand.u32 %v458, 4294901760
  %460 = vmatpush1.msra.mxu0 %v459
  %461 = vmatprep.subr.mxu0 0.0
  %v462 = vand.u32 %v17, 4294901760
  %v463 = vsub.f32 %v17, %v462
  %v464 = vand.u32 %v463, 4294901760
  %465 = vmatpush1.msra.mxu0 %v464
  %466 = vmatprep.subr.mxu0 0.0
  %v467 = vand.u32 %v18, 4294901760
  %v468 = vsub.f32 %v18, %v467
  %v469 = vand.u32 %v468, 4294901760
  %470 = vmatpush1.msra.mxu0 %v469
  %471 = vmatprep.subr.mxu0 0.0
  %472 = vmatpush1.msra.mxu0 0.0
  %473 = vmatprep.subr.mxu0 0.0
  %474 = vmatpush1.msra.mxu0 0.0
  %475 = vmatprep.subr.mxu0 0.0
  %476 = vmatpush1.msra.mxu0 0.0
  %477 = vmatprep.subr.mxu0 0.0
  %478 = vmatpush1.msra.mxu0 0.0
  %479 = vmatprep.subr.mxu0 0.0
  %480 = vmatpush1.msra.mxu0 0.0
  %481 = vmatprep.subr.mxu0 0.0
  %482 = vmatpush1.msra.mxu0 0.0
  %483 = vmatprep.subr.mxu0 0.0
  %484 = vmatpush1.msra.mxu0 0.0
  %485 = vmatprep.subr.mxu0 0.0
  %486 = vmatpush1.msra.mxu0 0.0
  %487 = vmatprep.subr.mxu0 0.0
  %488 = vmatpush1.msra.mxu0 0.0
  %489 = vmatprep.subr.mxu0 0.0
  %490 = vmatpush1.msra.mxu0 0.0
  %491 = vmatprep.subr.mxu0 0.0
  %492 = vmatpush1.msra.mxu0 0.0
  %493 = vmatprep.subr.mxu0 0.0
  %494 = vmatpush1.msra.mxu0 0.0
  %495 = vmatprep.subr.mxu0 0.0
  %496 = vmatpush1.msra.mxu0 0.0
  %497 = vmatprep.subr.mxu0 0.0
  %498 = vmatpush1.msra.mxu0 0.0
  %499 = vmatprep.subr.mxu0 0.0
  %500 = vmatpush1.msra.mxu0 0.0
  %501 = vmatprep.subr.mxu0 0.0
  %502 = vmatpush1.msra.mxu0 0.0
  %503 = vmatprep.subr.mxu0 0.0
  %504 = vmatpush1.msra.mxu0 0.0
  %505 = vmatprep.subr.mxu0 0.0
  %506 = vmatpush1.msra.mxu0 0.0
  %507 = vmatprep.subr.mxu0 0.0
  %508 = vmatpush1.msra.mxu0 0.0
  %509 = vmatprep.subr.mxu0 0.0
  %510 = vmatpush1.msra.mxu0 0.0
  %511 = vmatprep.subr.mxu0 0.0
  %512 = vmatpush1.msra.mxu0 0.0
  %513 = vmatprep.subr.mxu0 0.0
  %514 = vmatpush1.msra.mxu0 0.0
  %515 = vmatprep.subr.mxu0 0.0
  %516 = vmatpush1.msra.mxu0 0.0
  %517 = vmatprep.subr.mxu0 0.0
  %518 = vmatpush1.msra.mxu0 0.0
  %519 = vmatprep.mubr.f32.mxu0 0.0
  %v520 = vand.u32 %v33, 4294901760
  %521 = vmatmul.mubr.f32.gmra.mrb[0].mxu0 %v520
  %v522 = vpop.f32.mrb[0].mxu0
  %v523 = vadd.f32 %v420, %v522
  %v524 = vpop.f32.mrb[0].mxu0
  %525 = vmatprep.mubr.f32.mxu0 0.0
  %v526 = vand.u32 %v35, 4294901760
  %527 = vmatmul.mubr.f32.gmra.mrb[0].mxu0 %v526
  %v528 = vpop.f32.mrb[0].mxu0
  %v529 = vadd.f32 %v428, %v528
  %v530 = vpop.f32.mrb[0].mxu0
  %531 = vdwg.mxu0
  %532 = vmatprep.subr.mxu0 0.0
  %v533 = vand.u32 %v11, 4294901760
  %534 = vmatpush1.msra.mxu0 %v533
  %535 = vmatprep.subr.mxu0 0.0
  %v536 = vand.u32 %v12, 4294901760
  %537 = vmatpush1.msra.mxu0 %v536
  %538 = vmatprep.subr.mxu0 0.0
  %v539 = vand.u32 %v13, 4294901760
  %540 = vmatpush1.msra.mxu0 %v539
  %541 = vmatprep.subr.mxu0 0.0
  %v542 = vand.u32 %v14, 4294901760
  %543 = vmatpush1.msra.mxu0 %v542
  %544 = vmatprep.subr.mxu0 0.0
  %v545 = vand.u32 %v15, 4294901760
  %546 = vmatpush1.msra.mxu0 %v545
  %547 = vmatprep.subr.mxu0 0.0
  %v548 = vand.u32 %v16, 4294901760
  %549 = vmatpush1.msra.mxu0 %v548
  %550 = vmatprep.subr.mxu0 0.0
  %v551 = vand.u32 %v17, 4294901760
  %552 = vmatpush1.msra.mxu0 %v551
  %553 = vmatprep.subr.mxu0 0.0
  %v554 = vand.u32 %v18, 4294901760
  %555 = vmatpush1.msra.mxu0 %v554
  %556 = vmatprep.subr.mxu0 0.0
  %557 = vmatpush1.msra.mxu0 0.0
  %558 = vmatprep.subr.mxu0 0.0
  %559 = vmatpush1.msra.mxu0 0.0
  %560 = vmatprep.subr.mxu0 0.0
  %561 = vmatpush1.msra.mxu0 0.0
  %562 = vmatprep.subr.mxu0 0.0
  %563 = vmatpush1.msra.mxu0 0.0
  %564 = vmatprep.subr.mxu0 0.0
  %565 = vmatpush1.msra.mxu0 0.0
  %566 = vmatprep.subr.mxu0 0.0
  %567 = vmatpush1.msra.mxu0 0.0
  %568 = vmatprep.subr.mxu0 0.0
  %569 = vmatpush1.msra.mxu0 0.0
  %570 = vmatprep.subr.mxu0 0.0
  %571 = vmatpush1.msra.mxu0 0.0
  %572 = vmatprep.subr.mxu0 0.0
  %573 = vmatpush1.msra.mxu0 0.0
  %574 = vmatprep.subr.mxu0 0.0
  %575 = vmatpush1.msra.mxu0 0.0
  %576 = vmatprep.subr.mxu0 0.0
  %577 = vmatpush1.msra.mxu0 0.0
  %578 = vmatprep.subr.mxu0 0.0
  %579 = vmatpush1.msra.mxu0 0.0
  %580 = vmatprep.subr.mxu0 0.0
  %581 = vmatpush1.msra.mxu0 0.0
  %582 = vmatprep.subr.mxu0 0.0
  %583 = vmatpush1.msra.mxu0 0.0
  %584 = vmatprep.subr.mxu0 0.0
  %585 = vmatpush1.msra.mxu0 0.0
  %586 = vmatprep.subr.mxu0 0.0
  %587 = vmatpush1.msra.mxu0 0.0
  %588 = vmatprep.subr.mxu0 0.0
  %589 = vmatpush1.msra.mxu0 0.0
  %590 = vmatprep.subr.mxu0 0.0
  %591 = vmatpush1.msra.mxu0 0.0
  %592 = vmatprep.subr.mxu0 0.0
  %593 = vmatpush1.msra.mxu0 0.0
  %594 = vmatprep.subr.mxu0 0.0
  %595 = vmatpush1.msra.mxu0 0.0
  %596 = vmatprep.subr.mxu0 0.0
  %597 = vmatpush1.msra.mxu0 0.0
  %598 = vmatprep.subr.mxu0 0.0
  %599 = vmatpush1.msra.mxu0 0.0
  %600 = vmatprep.subr.mxu0 0.0
  %601 = vmatpush1.msra.mxu0 0.0
  %602 = vmatprep.subr.mxu0 0.0
  %603 = vmatpush1.msra.mxu0 0.0
  %604 = vmatprep.mubr.f32.mxu0 0.0
  %v605 = vand.u32 %v33, 4294901760
  %606 = vmatmul.mubr.f32.gmra.mrb[0].mxu0 %v605
  %v607 = vpop.f32.mrb[0].mxu0
  %v608 = vadd.f32 %v523, %v607
  %v609 = vpop.f32.mrb[0].mxu0
  %610 = vmatprep.mubr.f32.mxu0 0.0
  %v611 = vand.u32 %v35, 4294901760
  %612 = vmatmul.mubr.f32.gmra.mrb[0].mxu0 %v611
  %v613 = vpop.f32.mrb[0].mxu0
  %v614 = vadd.f32 %v529, %v613
  %v615 = vpop.f32.mrb[0].mxu0
  %616 = vdwg.mxu0
  %v617 = vrot.slane %v608, 4
  %v618 = vadd.f32 %v608, %v617
  %v619 = vrot.slane %v618, 2
  %v620 = vadd.f32 %v618, %v619
  %v621 = vrot.slane %v620, 1
  %v622 = vadd.f32 %v620, %v621
  %v623 = vrcp.pop 8.0
  %v624 = vmul.f32 %v622, %v623
  %v625 = vsub.f32 %v608, %v624
  %v626 = vmul.f32 %v625, %v625
  %v627 = vrot.slane %v626, 4
  %v628 = vadd.f32 %v626, %v627
  %v629 = vrot.slane %v628, 2
  %v630 = vadd.f32 %v628, %v629
  %v631 = vrot.slane %v630, 1
  %v632 = vadd.f32 %v630, %v631
  %v633 = vmul.f32 %v632, %v623
  %v634 = vadd.f32 %v633, 1e-05
  %v635 = vrsqrt.pop %v634
  %v636 = vmul.f32 %v625, %v635
  %v637 = vrot.slane %v614, 4
  %v638 = vadd.f32 %v614, %v637
  %v639 = vrot.slane %v638, 2
  %v640 = vadd.f32 %v638, %v639
  %v641 = vrot.slane %v640, 1
  %v642 = vadd.f32 %v640, %v641
  %v643 = vmul.f32 %v642, %v623
  %v644 = vsub.f32 %v614, %v643
  %v645 = vmul.f32 %v644, %v644
  %v646 = vrot.slane %v645, 4
  %v647 = vadd.f32 %v645, %v646
  %v648 = vrot.slane %v647, 2
  %v649 = vadd.f32 %v647, %v648
  %v650 = vrot.slane %v649, 1
  %v651 = vadd.f32 %v649, %v650
  %v652 = vmul.f32 %v651, %v623
  %v653 = vadd.f32 %v652, 1e-05
  %v654 = vrsqrt.pop %v653
  %v655 = vmul.f32 %v644, %v654
  %656 = vset.pattern.permute.xlu0 65
  %657 = vperm.xlu0 %656, %v19
  %v658 = vpop.permute.xlu0 %657
  %660 = vset.pattern.permute.xlu0 65
  %661 = vperm.xlu0 %660, %v20
  %v662 = vpop.permute.xlu0 %661
  %v664 = vmul.f32 %v636, %v658
  %v665 = vmul.f32 %v655, %v662
  %666 = vset.pattern.permute.xlu0 66
  %667 = vperm.xlu0 %666, %v19
  %v668 = vpop.permute.xlu0 %667
  %670 = vset.pattern.permute.xlu0 66
  %671 = vperm.xlu0 %670, %v20
  %v672 = vpop.permute.xlu0 %671
  %v674 = vadd.f32 %v664, %v668
  %v675 = vadd.f32 %v665, %v672
  %v676 = vmul.f32 %v674, 0.5
  %v677 = vmul.f32 %v675, 0.5
  %v678 = vmul.f32 %v674, 0.70710677
  %v679 = vmul.f32 %v675, 0.70710677
  %vm680 = vcmp.ge.f32.partialorder %v678, 0.0
  %vm681 = vcmp.ge.f32.partialorder %v679, 0.0
  %v682 = vsel %vm680, 1.0, -1.0
  %v683 = vsel %vm681, 1.0, -1.0
  %v684 = vand.u32 2147483647, %v678
  %v685 = vand.u32 2147483647, %v679
  %v686 = vmul.f32 %v684, 0.3275911
  %v687 = vmul.f32 %v685, 0.3275911
  %v688 = vadd.f32 %v686, 1.0
  %v689 = vadd.f32 %v687, 1.0
  %v690 = vrcp.pop %v688
  %v691 = vrcp.pop %v689
  %v692 = vmul.f32 %v688, %v690
  %v693 = vmul.f32 %v689, %v691
  %v694 = vsub.f32 2.0, %v692
  %v695 = vsub.f32 2.0, %v693
  %v696 = vmul.f32 %v690, %v694
  %v697 = vmul.f32 %v691, %v695
  %v698 = vmul.f32 %v696, 1.0614054
  %v699 = vmul.f32 %v697, 1.0614054
  %v700 = vadd.f32 %v698, -1.4531521
  %v701 = vadd.f32 %v699, -1.4531521
  %v702 = vmul.f32 %v700, %v696
  %v703 = vmul.f32 %v701, %v697
  %v704 = vadd.f32 %v702, 1.4214138
  %v705 = vadd.f32 %v703, 1.4214138
  %v706 = vmul.f32 %v704, %v696
  %v707 = vmul.f32 %v705, %v697
  %v708 = vadd.f32 %v706, -0.28449672
  %v709 = vadd.f32 %v707, -0.28449672
  %v710 = vmul.f32 %v708, %v696
  %v711 = vmul.f32 %v709, %v697
  %v712 = vadd.f32 %v710, 0.2548296
  %v713 = vadd.f32 %v711, 0.2548296
  %v714 = vmul.f32 %v712, %v696
  %v715 = vmul.f32 %v713, %v697
  %v716 = vsub.f32 0.0, %v684
  %v717 = vsub.f32 0.0, %v685
  %v718 = vmul.f32 %v716, %v684
  %v719 = vmul.f32 %v717, %v685
  %v720 = vmul.f32 %v718, 1.442695
  %v721 = vpow.pop %v720
  %v722 = vmul.f32 %v719, 1.442695
  %v723 = vpow.pop %v722
  %v724 = vmul.f32 %v714, %v721
  %v725 = vmul.f32 %v715, %v723
  %v726 = vsub.f32 1.0, %v724
  %v727 = vsub.f32 1.0, %v725
  %v728 = vmul.f32 %v682, %v726
  %v729 = vmul.f32 %v683, %v727
  %v730 = vadd.f32 %v728, 1.0
  %v731 = vadd.f32 %v729, 1.0
  %v732 = vmul.f32 %v676, %v730
  %v733 = vmul.f32 %v677, %v731
  %vm734 = vcmask 130048
  %v736 = vsel %vm734, %v21, 0
  %738 = vmatprep.subr.mxu0 0.0
  %v739 = vand.u32 %v732, 4294901760
  %740 = vmatpush1.msra.mxu0 %v739
  %741 = vmatprep.subr.mxu0 0.0
  %v742 = vand.u32 %v733, 4294901760
  %743 = vmatpush1.msra.mxu0 %v742
  %744 = vmatprep.subr.mxu0 0.0
  %745 = vmatpush1.msra.mxu0 0.0
  %746 = vmatprep.subr.mxu0 0.0
  %747 = vmatpush1.msra.mxu0 0.0
  %748 = vmatprep.subr.mxu0 0.0
  %749 = vmatpush1.msra.mxu0 0.0
  %750 = vmatprep.subr.mxu0 0.0
  %751 = vmatpush1.msra.mxu0 0.0
  %752 = vmatprep.subr.mxu0 0.0
  %753 = vmatpush1.msra.mxu0 0.0
  %754 = vmatprep.subr.mxu0 0.0
  %755 = vmatpush1.msra.mxu0 0.0
  %756 = vmatprep.subr.mxu0 0.0
  %757 = vmatpush1.msra.mxu0 0.0
  %758 = vmatprep.subr.mxu0 0.0
  %759 = vmatpush1.msra.mxu0 0.0
  %760 = vmatprep.subr.mxu0 0.0
  %761 = vmatpush1.msra.mxu0 0.0
  %762 = vmatprep.subr.mxu0 0.0
  %763 = vmatpush1.msra.mxu0 0.0
  %764 = vmatprep.subr.mxu0 0.0
  %765 = vmatpush1.msra.mxu0 0.0
  %766 = vmatprep.subr.mxu0 0.0
  %767 = vmatpush1.msra.mxu0 0.0
  %768 = vmatprep.subr.mxu0 0.0
  %769 = vmatpush1.msra.mxu0 0.0
  %770 = vmatprep.subr.mxu0 0.0
  %771 = vmatpush1.msra.mxu0 0.0
  %772 = vmatprep.subr.mxu0 0.0
  %773 = vmatpush1.msra.mxu0 0.0
  %774 = vmatprep.subr.mxu0 0.0
  %775 = vmatpush1.msra.mxu0 0.0
  %776 = vmatprep.subr.mxu0 0.0
  %777 = vmatpush1.msra.mxu0 0.0
  %778 = vmatprep.subr.mxu0 0.0
  %779 = vmatpush1.msra.mxu0 0.0
  %780 = vmatprep.subr.mxu0 0.0
  %781 = vmatpush1.msra.mxu0 0.0
  %782 = vmatprep.subr.mxu0 0.0
  %783 = vmatpush1.msra.mxu0 0.0
  %784 = vmatprep.subr.mxu0 0.0
  %785 = vmatpush1.msra.mxu0 0.0
  %786 = vmatprep.subr.mxu0 0.0
  %787 = vmatpush1.msra.mxu0 0.0
  %788 = vmatprep.subr.mxu0 0.0
  %789 = vmatpush1.msra.mxu0 0.0
  %790 = vmatprep.subr.mxu0 0.0
  %791 = vmatpush1.msra.mxu0 0.0
  %792 = vmatprep.subr.mxu0 0.0
  %793 = vmatpush1.msra.mxu0 0.0
  %794 = vmatprep.subr.mxu0 0.0
  %795 = vmatpush1.msra.mxu0 0.0
  %796 = vmatprep.subr.mxu0 0.0
  %797 = vmatpush1.msra.mxu0 0.0
  %798 = vmatprep.subr.mxu0 0.0
  %799 = vmatpush1.msra.mxu0 0.0
  %800 = vmatprep.subr.mxu0 0.0
  %801 = vmatpush1.msra.mxu0 0.0
  %802 = vmatprep.subr.mxu0 0.0
  %803 = vmatpush1.msra.mxu0 0.0
  %804 = vmatprep.mubr.f32.mxu0 0.0
  %v805 = vand.u32 %v736, 4294901760
  %v806 = vsub.f32 %v736, %v805
  %v807 = vand.u32 %v806, 4294901760
  %v808 = vsub.f32 %v806, %v807
  %v809 = vand.u32 %v808, 4294901760
  %810 = vmatmul.mubr.f32.gmra.mrb[0].mxu0 %v809
  %v811 = vpop.f32.mrb[0].mxu0
  %v812 = vadd.f32 0.0, %v811
  %v813 = vpop.f32.mrb[0].mxu0
  %814 = vdwg.mxu0
  %815 = vmatprep.subr.mxu0 0.0
  %v816 = vand.u32 %v732, 4294901760
  %v817 = vsub.f32 %v732, %v816
  %v818 = vand.u32 %v817, 4294901760
  %v819 = vsub.f32 %v817, %v818
  %v820 = vand.u32 %v819, 4294901760
  %821 = vmatpush1.msra.mxu0 %v820
  %822 = vmatprep.subr.mxu0 0.0
  %v823 = vand.u32 %v733, 4294901760
  %v824 = vsub.f32 %v733, %v823
  %v825 = vand.u32 %v824, 4294901760
  %v826 = vsub.f32 %v824, %v825
  %v827 = vand.u32 %v826, 4294901760
  %828 = vmatpush1.msra.mxu0 %v827
  %829 = vmatprep.subr.mxu0 0.0
  %830 = vmatpush1.msra.mxu0 0.0
  %831 = vmatprep.subr.mxu0 0.0
  %832 = vmatpush1.msra.mxu0 0.0
  %833 = vmatprep.subr.mxu0 0.0
  %834 = vmatpush1.msra.mxu0 0.0
  %835 = vmatprep.subr.mxu0 0.0
  %836 = vmatpush1.msra.mxu0 0.0
  %837 = vmatprep.subr.mxu0 0.0
  %838 = vmatpush1.msra.mxu0 0.0
  %839 = vmatprep.subr.mxu0 0.0
  %840 = vmatpush1.msra.mxu0 0.0
  %841 = vmatprep.subr.mxu0 0.0
  %842 = vmatpush1.msra.mxu0 0.0
  %843 = vmatprep.subr.mxu0 0.0
  %844 = vmatpush1.msra.mxu0 0.0
  %845 = vmatprep.subr.mxu0 0.0
  %846 = vmatpush1.msra.mxu0 0.0
  %847 = vmatprep.subr.mxu0 0.0
  %848 = vmatpush1.msra.mxu0 0.0
  %849 = vmatprep.subr.mxu0 0.0
  %850 = vmatpush1.msra.mxu0 0.0
  %851 = vmatprep.subr.mxu0 0.0
  %852 = vmatpush1.msra.mxu0 0.0
  %853 = vmatprep.subr.mxu0 0.0
  %854 = vmatpush1.msra.mxu0 0.0
  %855 = vmatprep.subr.mxu0 0.0
  %856 = vmatpush1.msra.mxu0 0.0
  %857 = vmatprep.subr.mxu0 0.0
  %858 = vmatpush1.msra.mxu0 0.0
  %859 = vmatprep.subr.mxu0 0.0
  %860 = vmatpush1.msra.mxu0 0.0
  %861 = vmatprep.subr.mxu0 0.0
  %862 = vmatpush1.msra.mxu0 0.0
  %863 = vmatprep.subr.mxu0 0.0
  %864 = vmatpush1.msra.mxu0 0.0
  %865 = vmatprep.subr.mxu0 0.0
  %866 = vmatpush1.msra.mxu0 0.0
  %867 = vmatprep.subr.mxu0 0.0
  %868 = vmatpush1.msra.mxu0 0.0
  %869 = vmatprep.subr.mxu0 0.0
  %870 = vmatpush1.msra.mxu0 0.0
  %871 = vmatprep.subr.mxu0 0.0
  %872 = vmatpush1.msra.mxu0 0.0
  %873 = vmatprep.subr.mxu0 0.0
  %874 = vmatpush1.msra.mxu0 0.0
  %875 = vmatprep.subr.mxu0 0.0
  %876 = vmatpush1.msra.mxu0 0.0
  %877 = vmatprep.subr.mxu0 0.0
  %878 = vmatpush1.msra.mxu0 0.0
  %879 = vmatprep.subr.mxu0 0.0
  %880 = vmatpush1.msra.mxu0 0.0
  %881 = vmatprep.subr.mxu0 0.0
  %882 = vmatpush1.msra.mxu0 0.0
  %883 = vmatprep.subr.mxu0 0.0
  %884 = vmatpush1.msra.mxu0 0.0
  %885 = vmatprep.subr.mxu0 0.0
  %886 = vmatpush1.msra.mxu0 0.0
  %887 = vmatprep.subr.mxu0 0.0
  %888 = vmatpush1.msra.mxu0 0.0
  %889 = vmatprep.mubr.f32.mxu0 0.0
  %v890 = vand.u32 %v736, 4294901760
  %891 = vmatmul.mubr.f32.gmra.mrb[0].mxu0 %v890
  %v892 = vpop.f32.mrb[0].mxu0
  %v893 = vadd.f32 %v812, %v892
  %v894 = vpop.f32.mrb[0].mxu0
  %895 = vdwg.mxu0
  %896 = vmatprep.subr.mxu0 0.0
  %v897 = vand.u32 %v732, 4294901760
  %v898 = vsub.f32 %v732, %v897
  %899 = vmatpush1.msra.mxu0 %v898
  %900 = vmatprep.subr.mxu0 0.0
  %v901 = vand.u32 %v733, 4294901760
  %v902 = vsub.f32 %v733, %v901
  %903 = vmatpush1.msra.mxu0 %v902
  %904 = vmatprep.subr.mxu0 0.0
  %905 = vmatpush1.msra.mxu0 0.0
  %906 = vmatprep.subr.mxu0 0.0
  %907 = vmatpush1.msra.mxu0 0.0
  %908 = vmatprep.subr.mxu0 0.0
  %909 = vmatpush1.msra.mxu0 0.0
  %910 = vmatprep.subr.mxu0 0.0
  %911 = vmatpush1.msra.mxu0 0.0
  %912 = vmatprep.subr.mxu0 0.0
  %913 = vmatpush1.msra.mxu0 0.0
  %914 = vmatprep.subr.mxu0 0.0
  %915 = vmatpush1.msra.mxu0 0.0
  %916 = vmatprep.subr.mxu0 0.0
  %917 = vmatpush1.msra.mxu0 0.0
  %918 = vmatprep.subr.mxu0 0.0
  %919 = vmatpush1.msra.mxu0 0.0
  %920 = vmatprep.subr.mxu0 0.0
  %921 = vmatpush1.msra.mxu0 0.0
  %922 = vmatprep.subr.mxu0 0.0
  %923 = vmatpush1.msra.mxu0 0.0
  %924 = vmatprep.subr.mxu0 0.0
  %925 = vmatpush1.msra.mxu0 0.0
  %926 = vmatprep.subr.mxu0 0.0
  %927 = vmatpush1.msra.mxu0 0.0
  %928 = vmatprep.subr.mxu0 0.0
  %929 = vmatpush1.msra.mxu0 0.0
  %930 = vmatprep.subr.mxu0 0.0
  %931 = vmatpush1.msra.mxu0 0.0
  %932 = vmatprep.subr.mxu0 0.0
  %933 = vmatpush1.msra.mxu0 0.0
  %934 = vmatprep.subr.mxu0 0.0
  %935 = vmatpush1.msra.mxu0 0.0
  %936 = vmatprep.subr.mxu0 0.0
  %937 = vmatpush1.msra.mxu0 0.0
  %938 = vmatprep.subr.mxu0 0.0
  %939 = vmatpush1.msra.mxu0 0.0
  %940 = vmatprep.subr.mxu0 0.0
  %941 = vmatpush1.msra.mxu0 0.0
  %942 = vmatprep.subr.mxu0 0.0
  %943 = vmatpush1.msra.mxu0 0.0
  %944 = vmatprep.subr.mxu0 0.0
  %945 = vmatpush1.msra.mxu0 0.0
  %946 = vmatprep.subr.mxu0 0.0
  %947 = vmatpush1.msra.mxu0 0.0
  %948 = vmatprep.subr.mxu0 0.0
  %949 = vmatpush1.msra.mxu0 0.0
  %950 = vmatprep.subr.mxu0 0.0
  %951 = vmatpush1.msra.mxu0 0.0
  %952 = vmatprep.subr.mxu0 0.0
  %953 = vmatpush1.msra.mxu0 0.0
  %954 = vmatprep.subr.mxu0 0.0
  %955 = vmatpush1.msra.mxu0 0.0
  %956 = vmatprep.subr.mxu0 0.0
  %957 = vmatpush1.msra.mxu0 0.0
  %958 = vmatprep.subr.mxu0 0.0
  %959 = vmatpush1.msra.mxu0 0.0
  %960 = vmatprep.subr.mxu0 0.0
  %961 = vmatpush1.msra.mxu0 0.0
  %962 = vmatprep.subr.mxu0 0.0
  %963 = vmatpush1.msra.mxu0 0.0
  %964 = vmatprep.mubr.f32.mxu0 0.0
  %v965 = vand.u32 %v736, 4294901760
  %v966 = vsub.f32 %v736, %v965
  %967 = vmatmul.mubr.f32.gmra.mrb[0].mxu0 %v966
  %v968 = vpop.f32.mrb[0].mxu0
  %v969 = vadd.f32 %v893, %v968
  %v970 = vpop.f32.mrb[0].mxu0
  %971 = vdwg.mxu0
  %972 = vmatprep.subr.mxu0 0.0
  %v973 = vand.u32 %v732, 4294901760
  %974 = vmatpush1.msra.mxu0 %v973
  %975 = vmatprep.subr.mxu0 0.0
  %v976 = vand.u32 %v733, 4294901760
  %977 = vmatpush1.msra.mxu0 %v976
  %978 = vmatprep.subr.mxu0 0.0
  %979 = vmatpush1.msra.mxu0 0.0
  %980 = vmatprep.subr.mxu0 0.0
  %981 = vmatpush1.msra.mxu0 0.0
  %982 = vmatprep.subr.mxu0 0.0
  %983 = vmatpush1.msra.mxu0 0.0
  %984 = vmatprep.subr.mxu0 0.0
  %985 = vmatpush1.msra.mxu0 0.0
  %986 = vmatprep.subr.mxu0 0.0
  %987 = vmatpush1.msra.mxu0 0.0
  %988 = vmatprep.subr.mxu0 0.0
  %989 = vmatpush1.msra.mxu0 0.0
  %990 = vmatprep.subr.mxu0 0.0
  %991 = vmatpush1.msra.mxu0 0.0
  %992 = vmatprep.subr.mxu0 0.0
  %993 = vmatpush1.msra.mxu0 0.0
  %994 = vmatprep.subr.mxu0 0.0
  %995 = vmatpush1.msra.mxu0 0.0
  %996 = vmatprep.subr.mxu0 0.0
  %997 = vmatpush1.msra.mxu0 0.0
  %998 = vmatprep.subr.mxu0 0.0
  %999 = vmatpush1.msra.mxu0 0.0
  %1000 = vmatprep.subr.mxu0 0.0
  %1001 = vmatpush1.msra.mxu0 0.0
  %1002 = vmatprep.subr.mxu0 0.0
  %1003 = vmatpush1.msra.mxu0 0.0
  %1004 = vmatprep.subr.mxu0 0.0
  %1005 = vmatpush1.msra.mxu0 0.0
  %1006 = vmatprep.subr.mxu0 0.0
  %1007 = vmatpush1.msra.mxu0 0.0
  %1008 = vmatprep.subr.mxu0 0.0
  %1009 = vmatpush1.msra.mxu0 0.0
  %1010 = vmatprep.subr.mxu0 0.0
  %1011 = vmatpush1.msra.mxu0 0.0
  %1012 = vmatprep.subr.mxu0 0.0
  %1013 = vmatpush1.msra.mxu0 0.0
  %1014 = vmatprep.subr.mxu0 0.0
  %1015 = vmatpush1.msra.mxu0 0.0
  %1016 = vmatprep.subr.mxu0 0.0
  %1017 = vmatpush1.msra.mxu0 0.0
  %1018 = vmatprep.subr.mxu0 0.0
  %1019 = vmatpush1.msra.mxu0 0.0
  %1020 = vmatprep.subr.mxu0 0.0
  %1021 = vmatpush1.msra.mxu0 0.0
  %1022 = vmatprep.subr.mxu0 0.0
  %1023 = vmatpush1.msra.mxu0 0.0
  %1024 = vmatprep.subr.mxu0 0.0
  %1025 = vmatpush1.msra.mxu0 0.0
  %1026 = vmatprep.subr.mxu0 0.0
  %1027 = vmatpush1.msra.mxu0 0.0
  %1028 = vmatprep.subr.mxu0 0.0
  %1029 = vmatpush1.msra.mxu0 0.0
  %1030 = vmatprep.subr.mxu0 0.0
  %1031 = vmatpush1.msra.mxu0 0.0
  %1032 = vmatprep.subr.mxu0 0.0
  %1033 = vmatpush1.msra.mxu0 0.0
  %1034 = vmatprep.subr.mxu0 0.0
  %1035 = vmatpush1.msra.mxu0 0.0
  %1036 = vmatprep.subr.mxu0 0.0
  %1037 = vmatpush1.msra.mxu0 0.0
  %1038 = vmatprep.mubr.f32.mxu0 0.0
  %v1039 = vand.u32 %v736, 4294901760
  %v1040 = vsub.f32 %v736, %v1039
  %v1041 = vand.u32 %v1040, 4294901760
  %1042 = vmatmul.mubr.f32.gmra.mrb[0].mxu0 %v1041
  %v1043 = vpop.f32.mrb[0].mxu0
  %v1044 = vadd.f32 %v969, %v1043
  %v1045 = vpop.f32.mrb[0].mxu0
  %1046 = vdwg.mxu0
  %1047 = vmatprep.subr.mxu0 0.0
  %v1048 = vand.u32 %v732, 4294901760
  %v1049 = vsub.f32 %v732, %v1048
  %v1050 = vand.u32 %v1049, 4294901760
  %1051 = vmatpush1.msra.mxu0 %v1050
  %1052 = vmatprep.subr.mxu0 0.0
  %v1053 = vand.u32 %v733, 4294901760
  %v1054 = vsub.f32 %v733, %v1053
  %v1055 = vand.u32 %v1054, 4294901760
  %1056 = vmatpush1.msra.mxu0 %v1055
  %1057 = vmatprep.subr.mxu0 0.0
  %1058 = vmatpush1.msra.mxu0 0.0
  %1059 = vmatprep.subr.mxu0 0.0
  %1060 = vmatpush1.msra.mxu0 0.0
  %1061 = vmatprep.subr.mxu0 0.0
  %1062 = vmatpush1.msra.mxu0 0.0
  %1063 = vmatprep.subr.mxu0 0.0
  %1064 = vmatpush1.msra.mxu0 0.0
  %1065 = vmatprep.subr.mxu0 0.0
  %1066 = vmatpush1.msra.mxu0 0.0
  %1067 = vmatprep.subr.mxu0 0.0
  %1068 = vmatpush1.msra.mxu0 0.0
  %1069 = vmatprep.subr.mxu0 0.0
  %1070 = vmatpush1.msra.mxu0 0.0
  %1071 = vmatprep.subr.mxu0 0.0
  %1072 = vmatpush1.msra.mxu0 0.0
  %1073 = vmatprep.subr.mxu0 0.0
  %1074 = vmatpush1.msra.mxu0 0.0
  %1075 = vmatprep.subr.mxu0 0.0
  %1076 = vmatpush1.msra.mxu0 0.0
  %1077 = vmatprep.subr.mxu0 0.0
  %1078 = vmatpush1.msra.mxu0 0.0
  %1079 = vmatprep.subr.mxu0 0.0
  %1080 = vmatpush1.msra.mxu0 0.0
  %1081 = vmatprep.subr.mxu0 0.0
  %1082 = vmatpush1.msra.mxu0 0.0
  %1083 = vmatprep.subr.mxu0 0.0
  %1084 = vmatpush1.msra.mxu0 0.0
  %1085 = vmatprep.subr.mxu0 0.0
  %1086 = vmatpush1.msra.mxu0 0.0
  %1087 = vmatprep.subr.mxu0 0.0
  %1088 = vmatpush1.msra.mxu0 0.0
  %1089 = vmatprep.subr.mxu0 0.0
  %1090 = vmatpush1.msra.mxu0 0.0
  %1091 = vmatprep.subr.mxu0 0.0
  %1092 = vmatpush1.msra.mxu0 0.0
  %1093 = vmatprep.subr.mxu0 0.0
  %1094 = vmatpush1.msra.mxu0 0.0
  %1095 = vmatprep.subr.mxu0 0.0
  %1096 = vmatpush1.msra.mxu0 0.0
  %1097 = vmatprep.subr.mxu0 0.0
  %1098 = vmatpush1.msra.mxu0 0.0
  %1099 = vmatprep.subr.mxu0 0.0
  %1100 = vmatpush1.msra.mxu0 0.0
  %1101 = vmatprep.subr.mxu0 0.0
  %1102 = vmatpush1.msra.mxu0 0.0
  %1103 = vmatprep.subr.mxu0 0.0
  %1104 = vmatpush1.msra.mxu0 0.0
  %1105 = vmatprep.subr.mxu0 0.0
  %1106 = vmatpush1.msra.mxu0 0.0
  %1107 = vmatprep.subr.mxu0 0.0
  %1108 = vmatpush1.msra.mxu0 0.0
  %1109 = vmatprep.subr.mxu0 0.0
  %1110 = vmatpush1.msra.mxu0 0.0
  %1111 = vmatprep.subr.mxu0 0.0
  %1112 = vmatpush1.msra.mxu0 0.0
  %1113 = vmatprep.subr.mxu0 0.0
  %1114 = vmatpush1.msra.mxu0 0.0
  %1115 = vmatprep.subr.mxu0 0.0
  %1116 = vmatpush1.msra.mxu0 0.0
  %1117 = vmatprep.mubr.f32.mxu0 0.0
  %v1118 = vand.u32 %v736, 4294901760
  %1119 = vmatmul.mubr.f32.gmra.mrb[0].mxu0 %v1118
  %v1120 = vpop.f32.mrb[0].mxu0
  %v1121 = vadd.f32 %v1044, %v1120
  %v1122 = vpop.f32.mrb[0].mxu0
  %1123 = vdwg.mxu0
  %1124 = vmatprep.subr.mxu0 0.0
  %v1125 = vand.u32 %v732, 4294901760
  %1126 = vmatpush1.msra.mxu0 %v1125
  %1127 = vmatprep.subr.mxu0 0.0
  %v1128 = vand.u32 %v733, 4294901760
  %1129 = vmatpush1.msra.mxu0 %v1128
  %1130 = vmatprep.subr.mxu0 0.0
  %1131 = vmatpush1.msra.mxu0 0.0
  %1132 = vmatprep.subr.mxu0 0.0
  %1133 = vmatpush1.msra.mxu0 0.0
  %1134 = vmatprep.subr.mxu0 0.0
  %1135 = vmatpush1.msra.mxu0 0.0
  %1136 = vmatprep.subr.mxu0 0.0
  %1137 = vmatpush1.msra.mxu0 0.0
  %1138 = vmatprep.subr.mxu0 0.0
  %1139 = vmatpush1.msra.mxu0 0.0
  %1140 = vmatprep.subr.mxu0 0.0
  %1141 = vmatpush1.msra.mxu0 0.0
  %1142 = vmatprep.subr.mxu0 0.0
  %1143 = vmatpush1.msra.mxu0 0.0
  %1144 = vmatprep.subr.mxu0 0.0
  %1145 = vmatpush1.msra.mxu0 0.0
  %1146 = vmatprep.subr.mxu0 0.0
  %1147 = vmatpush1.msra.mxu0 0.0
  %1148 = vmatprep.subr.mxu0 0.0
  %1149 = vmatpush1.msra.mxu0 0.0
  %1150 = vmatprep.subr.mxu0 0.0
  %1151 = vmatpush1.msra.mxu0 0.0
  %1152 = vmatprep.subr.mxu0 0.0
  %1153 = vmatpush1.msra.mxu0 0.0
  %1154 = vmatprep.subr.mxu0 0.0
  %1155 = vmatpush1.msra.mxu0 0.0
  %1156 = vmatprep.subr.mxu0 0.0
  %1157 = vmatpush1.msra.mxu0 0.0
  %1158 = vmatprep.subr.mxu0 0.0
  %1159 = vmatpush1.msra.mxu0 0.0
  %1160 = vmatprep.subr.mxu0 0.0
  %1161 = vmatpush1.msra.mxu0 0.0
  %1162 = vmatprep.subr.mxu0 0.0
  %1163 = vmatpush1.msra.mxu0 0.0
  %1164 = vmatprep.subr.mxu0 0.0
  %1165 = vmatpush1.msra.mxu0 0.0
  %1166 = vmatprep.subr.mxu0 0.0
  %1167 = vmatpush1.msra.mxu0 0.0
  %1168 = vmatprep.subr.mxu0 0.0
  %1169 = vmatpush1.msra.mxu0 0.0
  %1170 = vmatprep.subr.mxu0 0.0
  %1171 = vmatpush1.msra.mxu0 0.0
  %1172 = vmatprep.subr.mxu0 0.0
  %1173 = vmatpush1.msra.mxu0 0.0
  %1174 = vmatprep.subr.mxu0 0.0
  %1175 = vmatpush1.msra.mxu0 0.0
  %1176 = vmatprep.subr.mxu0 0.0
  %1177 = vmatpush1.msra.mxu0 0.0
  %1178 = vmatprep.subr.mxu0 0.0
  %1179 = vmatpush1.msra.mxu0 0.0
  %1180 = vmatprep.subr.mxu0 0.0
  %1181 = vmatpush1.msra.mxu0 0.0
  %1182 = vmatprep.subr.mxu0 0.0
  %1183 = vmatpush1.msra.mxu0 0.0
  %1184 = vmatprep.subr.mxu0 0.0
  %1185 = vmatpush1.msra.mxu0 0.0
  %1186 = vmatprep.subr.mxu0 0.0
  %1187 = vmatpush1.msra.mxu0 0.0
  %1188 = vmatprep.subr.mxu0 0.0
  %1189 = vmatpush1.msra.mxu0 0.0
  %1190 = vmatprep.mubr.f32.mxu0 0.0
  %v1191 = vand.u32 %v736, 4294901760
  %1192 = vmatmul.mubr.f32.gmra.mrb[0].mxu0 %v1191
  %v1193 = vpop.f32.mrb[0].mxu0
  %v1194 = vadd.f32 %v1121, %v1193
  %v1195 = vpop.f32.mrb[0].mxu0
  %1196 = vdwg.mxu0
  %1197 = vst [vmem:[%s2] sm:$0xf] %v1194
  // Predicated region
  $region10: #{dat_forward.1} parent=0 // pred_check
    _
  $region11: #{dat_forward.1} parent=0 // pred_check_branch
    %1199 = sbr.rel (0) target = $region13
  $region12: #{dat_forward.1} parent=0 // pred_region
    _
  $region13: #{dat_forward.1} parent=0 // pred_fallthru
    _
  // Predicated region
  $region14: #{dat_forward.1} parent=0 // pred_check
    _
  $region15: #{dat_forward.1} parent=0 // pred_check_branch
    %1201 = sbr.rel (0) target = $region17
  $region16: #{dat_forward.1} parent=0 // pred_region
    _
  $region17: #{dat_forward.1} parent=0 // pred_fallthru
    _

</llo_original>
